<compile_context>
chip_gen: v7x
topology: tpu7x:2x2x1
jax: 0.10.0
libtpu: 0.0.40
codegen_flags: <defaults>
</compile_context>

<pallas_src>
import numpy as np

import jax
import jax.numpy as jnp
from jax.experimental import pallas as pl
from jax.experimental.pallas import tpu as pltpu


def _bilinear_matrix_np(out_size: int, in_size: int) -> np.ndarray:
    """(out_size, in_size) bilinear interpolation matrix (align_corners=False)."""
    if out_size == in_size:
        return np.eye(out_size, dtype=np.float32)
    scale = in_size / out_size
    i = np.arange(out_size, dtype=np.float64)
    src = np.clip((i + 0.5) * scale - 0.5, 0.0, in_size - 1)
    lo = np.floor(src).astype(np.int64)
    hi = np.minimum(lo + 1, in_size - 1)
    w_hi = (src - lo).astype(np.float32)
    w_lo = (1.0 - w_hi).astype(np.float32)
    m = np.zeros((out_size, in_size), dtype=np.float32)
    rows = np.arange(out_size)
    np.add.at(m, (rows, lo), w_lo)
    np.add.at(m, (rows, hi), w_hi)
    return m


def _resize_crop_params(H: int, W: int, resize_size: int, crop_size: int):
    """torchvision Resize(int) + CenterCrop geometry (long side is truncated int())."""
    if W <= H:
        new_w = int(resize_size)
        new_h = int(resize_size * H / W)      # truncation, matching torchvision
    else:
        new_h = int(resize_size)
        new_w = int(resize_size * W / H)
    top = int(round((new_h - crop_size) / 2.0))
    left = int(round((new_w - crop_size) / 2.0))
    return new_h, new_w, top, left


def _aligned_tiles(n: int, align: int):
    """Divisors of n that are multiples of `align`; falls back to [n] (full dim)."""
    if n < align or n % align != 0:
        return [n]
    return [d for d in range(align, n + 1, align) if n % d == 0]


def _step_footprint_bytes(th, tw, crop, crop_pad):
    """Per-grid-step VMEM footprint: double-buffered IO blocks + scratch + temps."""
    io = th * tw * 4 + tw * crop_pad * 2 + crop * th * 2 + crop * crop_pad * 4
    temps = th * tw * 2 + th * crop_pad * (4 + 2) + 2 * crop * crop_pad * 4
    return 2 * io + crop * crop_pad * 4 + temps


def _pick_tiles(H, W, row_lo, row_hi, col_lo, col_hi, crop, crop_pad,
                tile_h=None, tile_w=None):
    """Pick (TH, TW) and the block-index band [k_lo, k_lo+n_k) along H and W.

    Cost model: HBM bytes actually DMA'd + per-grid-step overhead, subject to a
    v7x-friendly per-step VMEM budget.  Tiles must be divisors (so no partial,
    out-of-bounds blocks) and satisfy the (8,128) rule or equal the full dim.
    """
    if tile_h is not None:
        assert H % tile_h == 0 and (tile_h % 8 == 0 or tile_h == H), "bad tile_h"
        th_cands = [tile_h]
    else:
        th_cands = _aligned_tiles(H, 8)
    if tile_w is not None:
        assert W % tile_w == 0 and (tile_w % 128 == 0 or tile_w == W), "bad tile_w"
        tw_cands = [tile_w]
    else:
        tw_cands = _aligned_tiles(W, 128)

    HBM_BPS = 1.4e12          # nominal HBM bandwidth; relative cost only
    STEP_S = 0.4e-6           # per-grid-step overhead
    VMEM_BUDGET = 20 * 2**20  # keep per-step footprint well under v7x's 64 MiB

    best = None
    for th in th_cands:
        kh_lo = row_lo // th
        n_kh = (row_hi - 1) // th - kh_lo + 1
        for tw in tw_cands:
            kw_lo = col_lo // tw
            n_kw = (col_hi - 1) // tw - kw_lo + 1
            foot = _step_footprint_bytes(th, tw, crop, crop_pad)
            bytes_rd = n_kh * th * n_kw * tw * 4
            cost = bytes_rd / HBM_BPS + n_kh * n_kw * STEP_S
            infeasible = foot > VMEM_BUDGET
            key = (infeasible, foot if infeasible else cost)
            if best is None or key < best[0]:
                best = (key, th, tw, kh_lo, n_kh, kw_lo, n_kw)
    _, th, tw, kh_lo, n_kh, kw_lo, n_kw = best
    return th, tw, kh_lo, n_kh, kw_lo, n_kw


def preprocessing_single_cam(image, minv, maxv, meanv, stdv, *,
                             resize_size: int, crop_size: int,
                             tile_h=None, tile_w=None, out_dtype=jnp.float32):
    """image: (N, C, H, W) float32; minv/maxv/meanv/stdv: per-channel (C,) (or (C,1,1))."""
    image = jnp.asarray(image, jnp.float32)
    N, C, H, W = image.shape
    minv, maxv, meanv, stdv = (
        jnp.reshape(jnp.asarray(v, jnp.float32), (-1,)) for v in (minv, maxv, meanv, stdv))

    new_h, new_w, top, left = _resize_crop_params(H, W, resize_size, crop_size)
    # TODO(synk): CenterCrop pads when crop_size > resized size; not handled here.
    assert 0 <= top and 0 <= left and top + crop_size <= new_h and left + crop_size <= new_w, \
        "crop larger than resized image is not supported"

    crop = crop_size
    # Lane-dense crop dimension: pad to a multiple of 128 only when it helps
    # (e.g. 224 -> 256); tiny crops stay un-padded (full-dim blocks are legal).
    crop_pad = crop if (crop < 128 or crop % 128 == 0) else ((crop + 127) // 128) * 128

    # Bake the center crop into the separable interpolation matrices (host side).
    # TODO(synk): torchvision Resize defaults to antialias=True on tensors; this is
    # plain bilinear interpolation (no antialias low-pass), so downscales can differ.
    a_h_c = _bilinear_matrix_np(new_h, H)[top:top + crop, :]          # (crop, H)
    a_w_c = _bilinear_matrix_np(new_w, W)[left:left + crop, :]        # (crop, W)

    # Source row/col band actually referenced by the cropped matrices; the image
    # DMA (and the matrix DMAs) only ever touch blocks intersecting this band.
    row_nz = np.nonzero(np.any(a_h_c != 0.0, axis=0))[0]
    col_nz = np.nonzero(np.any(a_w_c != 0.0, axis=0))[0]
    row_lo, row_hi = int(row_nz[0]), int(row_nz[-1]) + 1
    col_lo, col_hi = int(col_nz[0]), int(col_nz[-1]) + 1

    th, tw, kh_lo, n_kh, kw_lo, n_kw = _pick_tiles(
        H, W, row_lo, row_hi, col_lo, col_hi, crop, crop_pad, tile_h, tile_w)

    # A_h stored pre-blocked as (H//th, crop, th): each H-tile is its own leading
    # index, so the BlockSpec last dims are (crop, th) == full dims (no 128 rule
    # violation and no in-kernel transpose / lane slicing).
    a_h_blk = np.ascontiguousarray(
        a_h_c.reshape(crop, H // th, th).transpose(1, 0, 2))
    a_h_blk = jnp.asarray(a_h_blk, jnp.bfloat16)                       # (H//th, crop, th)

    a_w_t = np.zeros((W, crop_pad), np.float32)
    a_w_t[:, :crop] = a_w_c.T
    a_w_t = jnp.asarray(a_w_t, jnp.bfloat16)                           # (W, crop_pad)

    # Fuse  ((x - minv)/maxv - meanv)/stdv  into one affine  x*scale + offset.
    scale = 1.0 / (maxv * stdv)                      # (C,)
    offset = -(minv / maxv + meanv) / stdv           # (C,)

    def kernel(scale_ref, offset_ref, img_ref, ah_ref, awt_ref, out_ref, acc_ref):
        c = pl.program_id(1)
        kh = pl.program_id(2)
        kw = pl.program_id(3)

        @pl.when(jnp.logical_and(kh == 0, kw == 0))
        def _init():
            acc_ref[...] = jnp.zeros_like(acc_ref)

        # Per-tile cast (no whole-image bf16 copy), bf16 MXU matmuls, f32 accumulate.
        x = img_ref[0, 0].astype(jnp.bfloat16)                               # (th, tw)
        y = jnp.dot(x, awt_ref[...], preferred_element_type=jnp.float32)     # (th, crop_pad)
        acc_ref[...] += jnp.dot(ah_ref[0], y.astype(jnp.bfloat16),
                                preferred_element_type=jnp.float32)          # (crop, crop_pad)

        @pl.when(jnp.logical_and(kh == n_kh - 1, kw == n_kw - 1))
        def _finalize():
            out_ref[0, 0] = (acc_ref[...] * scale_ref[c]
                             + offset_ref[c]).astype(out_ref.dtype)

    smem_spec = pl.BlockSpec(memory_space=pltpu.SMEM)

    # VMEM limit from the real per-step footprint (no 4x fudge); the tile search
    # keeps the footprint v7x-safe, so this normally stays at the 32 MiB floor.
    est = _step_footprint_bytes(th, tw, crop, crop_pad)
    vmem_limit = int(min(max(est + est // 4 + (8 << 20), 32 << 20), 96 << 20))

    rows_rd, cols_rd = n_kh * th, n_kw * tw
    flops = 2 * N * C * (rows_rd * cols_rd * crop_pad + n_kw * rows_rd * crop * crop_pad)
    bytes_acc = (N * C * (rows_rd * cols_rd * 4 + crop * crop_pad * 4)
                 + a_h_blk.size * 2 + a_w_t.size * 2)

    out = pl.pallas_call(
        kernel,
        out_shape=jax.ShapeDtypeStruct((N, C, crop, crop_pad), out_dtype),
        grid=(N, C, n_kh, n_kw),
        in_specs=[
            smem_spec,                                                     # scale  (C,)
            smem_spec,                                                     # offset (C,)
            pl.BlockSpec((1, 1, th, tw),
                         lambda n, c, kh, kw: (n, c, kh_lo + kh, kw_lo + kw)),   # image tile
            pl.BlockSpec((1, crop, th),
                         lambda n, c, kh, kw: (kh_lo + kh, 0, 0)),               # A_h tile
            pl.BlockSpec((tw, crop_pad),
                         lambda n, c, kh, kw: (kw_lo + kw, 0)),                  # A_w^T tile
        ],
        out_specs=pl.BlockSpec((1, 1, crop, crop_pad),
                               lambda n, c, kh, kw: (n, c, 0, 0)),
        scratch_shapes=[pltpu.VMEM((crop, crop_pad), jnp.float32)],
        compiler_params=pltpu.CompilerParams(
            dimension_semantics=("parallel", "parallel", "arbitrary", "arbitrary"),
            vmem_limit_bytes=vmem_limit),
        cost_estimate=pl.CostEstimate(flops=int(flops), transcendentals=0,
                                      bytes_accessed=int(bytes_acc)),
    )(scale, offset, image, a_h_blk, a_w_t)

    if crop_pad != crop:
        out = out[..., :crop]    # tiny lane-padded slab -> exact crop width
    return out


def _reference(image, minv, maxv, meanv, stdv, resize_size, crop_size):
    """Pure-JAX f32 reference: Resize -> CenterCrop -> scale -> normalize."""
    N, C, H, W = image.shape
    new_h, new_w, top, left = _resize_crop_params(H, W, resize_size, crop_size)
    a_h = jnp.asarray(_bilinear_matrix_np(new_h, H))
    a_w = jnp.asarray(_bilinear_matrix_np(new_w, W))
    resized = jnp.einsum("oh,nchw,pw->ncop", a_h, image, a_w)
    cropped = resized[:, :, top:top + crop_size, left:left + crop_size]
    x = (cropped - minv[None, :, None, None]) / maxv[None, :, None, None]
    return (x - meanv[None, :, None, None]) / stdv[None, :, None, None]


if __name__ == "__main__":
    key = jax.random.PRNGKey(0)
    k_img, k_min, k_max, k_mean, k_std, k_img2 = jax.random.split(key, 6)

    # Deterministic synthetic per-channel distribution parameters (module stores
    # them reshaped to (-1, 1, 1); we keep them as (C,)).
    C = 4
    minv = jax.random.uniform(k_min, (C,), dtype=jnp.float32, minval=0.0, maxval=0.1)
    maxv = jax.random.uniform(k_max, (C,), dtype=jnp.float32, minval=1.0, maxval=2.0)
    meanv = jax.random.uniform(k_mean, (C,), dtype=jnp.float32, minval=0.2, maxval=0.6)
    stdv = jax.random.uniform(k_std, (C,), dtype=jnp.float32, minval=0.5, maxval=1.5)

    # Case A: small square input (single-tile path chosen by the search).
    N, H, W = 2, 16, 16
    resize_size, crop_size = 12, 8
    image = jax.random.uniform(k_img, (N, C, H, W), dtype=jnp.float32)
    out = preprocessing_single_cam(image, minv, maxv, meanv, stdv,
                                   resize_size=resize_size, crop_size=crop_size)
    out = jax.block_until_ready(out)
    ref = _reference(image, minv, maxv, meanv, stdv, resize_size, crop_size)
    assert out.shape == ref.shape
    err_a = float(jnp.max(jnp.abs(out - ref)))
    assert jnp.allclose(out, ref, atol=5e-2, rtol=5e-2), f"case A max abs err {err_a}"

    # Case B: wide (landscape) input with forced tiling -> exercises the
    # multi-block accumulation path (4 H-blocks x 2 W-blocks), the nonzero
    # band offsets in the index maps, and the column-band DMA restriction
    # (only 2 of 6 W-blocks are ever read).
    N2, C2, H2, W2 = 1, 3, 32, 768
    resize2, crop2 = 24, 16
    image2 = jax.random.uniform(k_img2, (N2, C2, H2, W2), dtype=jnp.float32)
    out2 = preprocessing_single_cam(image2, minv[:C2], maxv[:C2], meanv[:C2], stdv[:C2],
                                    resize_size=resize2, crop_size=crop2,
                                    tile_h=8, tile_w=128)
    out2 = jax.block_until_ready(out2)
    ref2 = _reference(image2, minv[:C2], maxv[:C2], meanv[:C2], stdv[:C2], resize2, crop2)
    assert out2.shape == ref2.shape
    err_b = float(jnp.max(jnp.abs(out2 - ref2)))
    assert jnp.allclose(out2, ref2, atol=5e-2, rtol=5e-2), f"case B max abs err {err_b}"

    print("KERNEL_OK")
</pallas_src>

<mosaic_0001>
module attributes {stable_mosaic.version = 11 : i64} {
  func.func @kernel(%arg0: i32, %arg1: i32, %arg2: i32, %arg3: i32, %arg4: memref<4xf32, #tpu.memory_space<smem>>, %arg5: memref<4xf32, #tpu.memory_space<smem>>, %arg6: memref<1x1x16x16xf32, #tpu.memory_space<vmem>>, %arg7: memref<1x8x16xbf16, #tpu.memory_space<vmem>>, %arg8: memref<16x8xbf16, #tpu.memory_space<vmem>>, %arg9: memref<1x1x8x8xf32, #tpu.memory_space<vmem>>, %arg10: memref<8x8xf32, #tpu.memory_space<vmem>>) attributes {dimension_semantics = [#tpu.dimension_semantics<parallel>, #tpu.dimension_semantics<parallel>, #tpu.dimension_semantics<arbitrary>, #tpu.dimension_semantics<arbitrary>], iteration_bounds = array<i64: 2, 4, 1, 1>, scalar_prefetch = 0 : i64, scratch_operands = 1 : i64, tpu.core_type = #tpu.core_type<tc>, window_params = [{transform_indices = @transform_0, window_bounds = array<i64: 4>}, {transform_indices = @transform_1, window_bounds = array<i64: 4>}, {transform_indices = @transform_2, window_bounds = array<i64: 1, 1, 16, 16>}, {transform_indices = @transform_3, window_bounds = array<i64: 1, 8, 16>}, {transform_indices = @transform_4, window_bounds = array<i64: 16, 8>}, {transform_indices = @transform_5, window_bounds = array<i64: 1, 1, 8, 8>}]} {
    %c0_i32 = arith.constant 0 : i32
    %0 = arith.cmpi eq, %arg2, %c0_i32 : i32
    %c0_i32_0 = arith.constant 0 : i32
    %1 = arith.cmpi eq, %arg3, %c0_i32_0 : i32
    %2 = arith.andi %0, %1 : i1
    %3 = arith.extui %2 : i1 to i32
    %c0_i32_1 = arith.constant 0 : i32
    %4 = arith.cmpi ne, %3, %c0_i32_1 : i32
    scf.if %4 {
      %cst_18 = arith.constant 0.000000e+00 : f32
      %22 = vector.broadcast %cst_18 : f32 to vector<8x8xf32>
      %c0_19 = arith.constant 0 : index
      %c0_20 = arith.constant 0 : index
      %23 = vector.load %arg10[%c0_19, %c0_20] : memref<8x8xf32, #tpu.memory_space<vmem>>, vector<8x8xf32>
      tpu.vector_store %arg10[%c0_19, %c0_20], %22 {strides = array<i32>} : memref<8x8xf32, #tpu.memory_space<vmem>>, vector<8x8xf32>,
    } else {
    }
    %c0 = arith.constant 0 : index
    %c0_2 = arith.constant 0 : index
    %c0_3 = arith.constant 0 : index
    %c0_4 = arith.constant 0 : index
    %5 = vector.load %arg6[%c0, %c0_2, %c0_3, %c0_4] : memref<1x1x16x16xf32, #tpu.memory_space<vmem>>, vector<1x1x16x16xf32>
    %6 = vector.shape_cast %5 : vector<1x1x16x16xf32> to vector<16x16xf32>
    %7 = arith.truncf %6 : vector<16x16xf32> to vector<16x16xbf16>
    %c0_5 = arith.constant 0 : index
    %c0_6 = arith.constant 0 : index
    %8 = vector.load %arg8[%c0_5, %c0_6] : memref<16x8xbf16, #tpu.memory_space<vmem>>, vector<16x8xbf16>
    %cst = arith.constant dense<0.000000e+00> : vector<16x8xf32>
    %9 = tpu.matmul %7, %8, %cst {dimension_numbers = #tpu.dot_dimension_numbers<[1], [0], [0], [1], [0, 0, 1, 1], [], []>} : vector<16x16xbf16>, vector<16x8xbf16>, vector<16x8xf32> -> vector<16x8xf32>
    %c0_7 = arith.constant 0 : index
    %c0_8 = arith.constant 0 : index
    %10 = vector.load %arg10[%c0_7, %c0_8] : memref<8x8xf32, #tpu.memory_space<vmem>>, vector<8x8xf32>
    %c0_9 = arith.constant 0 : index
    %c0_10 = arith.constant 0 : index
    %c0_11 = arith.constant 0 : index
    %11 = vector.load %arg7[%c0_9, %c0_10, %c0_11] : memref<1x8x16xbf16, #tpu.memory_space<vmem>>, vector<1x8x16xbf16>
    %12 = vector.shape_cast %11 : vector<1x8x16xbf16> to vector<8x16xbf16>
    %13 = arith.truncf %9 : vector<16x8xf32> to vector<16x8xbf16>
    %cst_12 = arith.constant dense<0.000000e+00> : vector<8x8xf32>
    %14 = tpu.matmul %12, %13, %cst_12 {dimension_numbers = #tpu.dot_dimension_numbers<[1], [0], [0], [1], [0, 0, 1, 1], [], []>} : vector<8x16xbf16>, vector<16x8xbf16>, vector<8x8xf32> -> vector<8x8xf32>
    %15 = arith.addf %10, %14 : vector<8x8xf32>
    %c0_13 = arith.constant 0 : index
    %c0_14 = arith.constant 0 : index
    %16 = vector.load %arg10[%c0_13, %c0_14] : memref<8x8xf32, #tpu.memory_space<vmem>>, vector<8x8xf32>
    tpu.vector_store %arg10[%c0_13, %c0_14], %15 {strides = array<i32>} : memref<8x8xf32, #tpu.memory_space<vmem>>, vector<8x8xf32>,
    %c0_i32_15 = arith.constant 0 : i32
    %17 = arith.cmpi eq, %arg2, %c0_i32_15 : i32
    %c0_i32_16 = arith.constant 0 : i32
    %18 = arith.cmpi eq, %arg3, %c0_i32_16 : i32
    %19 = arith.andi %17, %18 : i1
    %20 = arith.extui %19 : i1 to i32
    %c0_i32_17 = arith.constant 0 : i32
    %21 = arith.cmpi ne, %20, %c0_i32_17 : i32
    scf.if %21 {
      %c0_18 = arith.constant 0 : index
      %c0_19 = arith.constant 0 : index
      %22 = vector.load %arg10[%c0_18, %c0_19] : memref<8x8xf32, #tpu.memory_space<vmem>>, vector<8x8xf32>
      %23 = arith.index_cast %arg1 : i32 to index
      %24 = memref.load %arg4[%23] : memref<4xf32, #tpu.memory_space<smem>>
      %25 = vector.broadcast %24 : f32 to vector<8x8xf32>
      %26 = arith.mulf %22, %25 : vector<8x8xf32>
      %27 = arith.index_cast %arg1 : i32 to index
      %28 = memref.load %arg5[%27] : memref<4xf32, #tpu.memory_space<smem>>
      %29 = vector.broadcast %28 : f32 to vector<8x8xf32>
      %30 = arith.addf %26, %29 : vector<8x8xf32>
      %c0_20 = arith.constant 0 : index
      %c0_21 = arith.constant 0 : index
      %c0_22 = arith.constant 0 : index
      %c0_23 = arith.constant 0 : index
      %31 = vector.load %arg9[%c0_20, %c0_21, %c0_22, %c0_23] : memref<1x1x8x8xf32, #tpu.memory_space<vmem>>, vector<1x1x8x8xf32>
      %32 = vector.shape_cast %31 : vector<1x1x8x8xf32> to vector<8x8xf32>
      %33 = vector.shape_cast %30 : vector<8x8xf32> to vector<1x1x8x8xf32>
      tpu.vector_store %arg9[%c0_20, %c0_21, %c0_22, %c0_23], %33 {strides = array<i32>} : memref<1x1x8x8xf32, #tpu.memory_space<vmem>>, vector<1x1x8x8xf32>,
    } else {
    }
    return
  }
  func.func @transform_0(%arg0: i32, %arg1: i32, %arg2: i32, %arg3: i32) -> i32 {
    %c0_i32 = arith.constant 0 : i32
    %c0_i32_0 = arith.constant 0 : i32
    return %c0_i32 : i32
  }
  func.func @transform_1(%arg0: i32, %arg1: i32, %arg2: i32, %arg3: i32) -> i32 {
    %c0_i32 = arith.constant 0 : i32
    %c0_i32_0 = arith.constant 0 : i32
    return %c0_i32 : i32
  }
  func.func @transform_2(%arg0: i32, %arg1: i32, %arg2: i32, %arg3: i32) -> (i32, i32, i32, i32) {
    %c0_i32 = arith.constant 0 : i32
    %0 = arith.addi %c0_i32, %arg2 : i32
    %c0_i32_0 = arith.constant 0 : i32
    %1 = arith.addi %c0_i32_0, %arg3 : i32
    %c0_i32_1 = arith.constant 0 : i32
    return %arg0, %arg1, %0, %1 : i32, i32, i32, i32
  }
  func.func @transform_3(%arg0: i32, %arg1: i32, %arg2: i32, %arg3: i32) -> (i32, i32, i32) {
    %c0_i32 = arith.constant 0 : i32
    %0 = arith.addi %c0_i32, %arg2 : i32
    %c0_i32_0 = arith.constant 0 : i32
    %c0_i32_1 = arith.constant 0 : i32
    %c0_i32_2 = arith.constant 0 : i32
    return %0, %c0_i32_0, %c0_i32_1 : i32, i32, i32
  }
  func.func @transform_4(%arg0: i32, %arg1: i32, %arg2: i32, %arg3: i32) -> (i32, i32) {
    %c0_i32 = arith.constant 0 : i32
    %0 = arith.addi %c0_i32, %arg3 : i32
    %c0_i32_0 = arith.constant 0 : i32
    %c0_i32_1 = arith.constant 0 : i32
    return %0, %c0_i32_0 : i32, i32
  }
  func.func @transform_5(%arg0: i32, %arg1: i32, %arg2: i32, %arg3: i32) -> (i32, i32, i32, i32) {
    %c0_i32 = arith.constant 0 : i32
    %c0_i32_0 = arith.constant 0 : i32
    %c0_i32_1 = arith.constant 0 : i32
    return %arg0, %arg1, %c0_i32, %c0_i32_0 : i32, i32, i32, i32
  }
}

</mosaic_0001>

<llo_original>
// kernel: tpu_custom_call.1
$region0: #{tpu_custom_call.1}
  #allocation0 [shape = 'u32[]', space=smem, size = 0x4, offset = 0x4, fixed_abs, tag = 'smem constant byte address 0x4 - core index']
  #allocation1 [shape = 'u32[144,128]{1,0:T(1,128)}', space=vmem, size = 0x12000, scoped, tag = 'internal scratch']
  #allocation2 [shape = 'f32[8,8]{1,0:T(8,128)}', space=vmem, size = 0x1000, scoped, tag = 'scratch operand']
  %s0 = inlined_call_operand.vmem [shape: f32[4], index: 0, kind: input, shape index: {}]
  %s1 = inlined_call_operand.vmem [shape: f32[4], index: 1, kind: input, shape index: {}]
  %s2 = inlined_call_operand.hbm [shape: f32[2,4,16,16], index: 2, kind: input, shape index: {}]
  %s3 = inlined_call_operand.vmem [shape: bf16[1,8,16], index: 3, kind: input, shape index: {}]
  %s4 = inlined_call_operand.vmem [shape: bf16[16,8], index: 4, kind: input, shape index: {}]
  %s5 = inlined_call_operand.hbm [shape: f32[2,4,8,8], index: 5, kind: output, shape index: {}]
  %s6 = sld [smem:[#allocation0]]
  $region73: #{tpu_custom_call.1} parent=0
    _
  %s8 = ssub.s32 1, %s6
  %s9 = scalar_select 0, %s8, %s6
  $region1: #{tpu_custom_call.1} parent=0
    #allocation3 [shape = 'u8[512]{0}', space=smem, size = 0x200, scoped, tag = 'input window, operand 0, single buffered']
    #allocation4 [shape = 's32[2]{0}', space=sflag, size = 0x8, scoped, tag = 'scoped memory for tpu_custom_call.1']
    #allocation5 [shape = 's32[2]{0}', space=sflag, size = 0x8, scoped, tag = 'scoped memory for tpu_custom_call.1']
    #allocation6 [shape = 's32[2]{0}', space=sflag, size = 0x8, scoped, tag = 'scoped memory for tpu_custom_call.1']
    #allocation7 [shape = 'u8[512]{0}', space=smem, size = 0x200, scoped, tag = 'input window, operand 1, single buffered']
    #allocation8 [shape = 's32[1]{0}', space=sflag, size = 0x4, scoped, tag = 'scoped memory for tpu_custom_call.1']
    #allocation9 [shape = 'u8[16384]{0}', space=vmem, size = 0x4000, scoped, tag = 'input window, operand 2']
    #allocation10 [shape = 'u8[8192]{0}', space=vmem, size = 0x2000, scoped, tag = 'output window, operand 0']
    %10 = vsyncpa [#allocation6], 0
    %11 = vsyncpa [#allocation8], 0
    %12 = vsyncpa [#allocation4], 0
    %s13 = scalar_lea.sflag [#allocation4], 1
    %14 = vsyncpa %s13, 0
    %15 = vsyncpa [#allocation5], 0
    %s16 = scalar_lea.sflag [#allocation5], 1
    %17 = vsyncpa %s16, 0
    loop: start=0, step=1, limit=10
    $region2: #{tpu_custom_call.1} parent=1 // loop_pre_header
      _
    $region3: #{tpu_custom_call.1} parent=1 // loop_header
      %s19 = sphi 0, %s23
      %p20 = scmp.ge.s32.totalorder %s19, 10
      %s26 = sphi 0, %s52
      %s27 = sphi 0, %s48
      %s28 = sphi 0, %s44
      %s29 = sphi 0, %s40
      %s30 = sphi 0, %s26
      %s31 = sphi 0, %s27
      %s32 = sphi 0, %s28
      %s33 = sphi 0, %s29
      %s34 = sphi 0, %s30
      %s35 = sphi 0, %s31
      %s36 = sphi 0, %s32
      %s37 = sphi 0, %s33
      %s53 = sphi 0, %s53
      %s55 = sphi 0, %s53
      %s56 = sphi 0, %s55
      %s70 = sphi 0, %s56
      %s74 = sphi 0, %s74
      %s76 = sphi 0, %s74
      %s77 = sphi 0, %s76
      %s91 = sphi 0, %s77
      %s103 = sphi 0, %s105
      %s106 = sphi 0, %s103
      %s107 = sphi 0, %s106
      %s123 = sphi 0, %s107
      %s129 = sphi 0, %s131
      %s132 = sphi 0, %s129
      %s133 = sphi 0, %s132
      %s149 = sphi 0, %s133
      %s155 = sphi 0, %s157
      %s158 = sphi 0, %s155
      %s159 = sphi 0, %s158
      %s175 = sphi 0, %s159
      %s183 = sphi 0, %s185
      %s186 = sphi 0, %s183
      %s187 = sphi 0, %s186
      %s203 = sphi 0, %s187
    $region4: #{tpu_custom_call.1} parent=1 // loop_header_branch
      %22 = sbr.rel (%p20) target = $region8
    $region5: #{tpu_custom_call.1} parent=1 // loop_body
      %s24 = ssub.s32 %s19, 1
      %s25 = ssub.s32 %s19, 2
      %s38 = sadd.s32 1, %s29
      %p39 = scmp.ge.s32.totalorder %s38, 1
      %s40 = scalar_select %p39, 0, %s38
      %s41 = sadd.s32 1, %s28
      %s42 = scalar_select %p39, %s41, %s28
      %p43 = scmp.ge.s32.totalorder %s42, 1
      %s44 = scalar_select %p43, 0, %s42
      %s45 = sadd.s32 1, %s27
      %s46 = scalar_select %p43, %s45, %s27
      %p47 = scmp.ge.s32.totalorder %s46, 4
      %s48 = scalar_select %p47, 0, %s46
      %s49 = sadd.s32 1, %s26
      %s50 = scalar_select %p47, %s49, %s26
      %p51 = scmp.ge.s32.totalorder %s50, 2
      %s52 = scalar_select %p51, 0, %s50
      %s54 = sadd.s32 %s53, 1
      %p57 = scmp.eq.s32.totalorder %s19, 7
      %p58 = scmp.ne.s32.totalorder %s53, %s55
      %p59 = scmp.eq.s32.totalorder %s19, 0
      %p60 = por %p58, %p59
      %p61 = scmp.ne.s32.totalorder %s53, %s55
      %p62 = scmp.eq.s32.totalorder %s24, 7
      %p63 = por %p61, %p62
      %p64 = scmp.ne.s32.totalorder %s55, %s56
      %p65 = scmp.eq.s32.totalorder %s24, 0
      %p66 = por %p64, %p65
      %p67 = scmp.ne.s32.totalorder %s55, %s56
      %p68 = scmp.eq.s32.totalorder %s25, 7
      %p69 = por %p67, %p68
      %p71 = scmp.ne.s32.totalorder %s56, %s70
      %p72 = scmp.eq.s32.totalorder %s25, 0
      %p73 = por %p71, %p72
      %s75 = sadd.s32 %s74, 1
      %p78 = scmp.eq.s32.totalorder %s19, 7
      %p79 = scmp.ne.s32.totalorder %s74, %s76
      %p80 = scmp.eq.s32.totalorder %s19, 0
      %p81 = por %p79, %p80
      %p82 = scmp.ne.s32.totalorder %s74, %s76
      %p83 = scmp.eq.s32.totalorder %s24, 7
      %p84 = por %p82, %p83
      %p85 = scmp.ne.s32.totalorder %s76, %s77
      %p86 = scmp.eq.s32.totalorder %s24, 0
      %p87 = por %p85, %p86
      %p88 = scmp.ne.s32.totalorder %s76, %s77
      %p89 = scmp.eq.s32.totalorder %s25, 7
      %p90 = por %p88, %p89
      %p92 = scmp.ne.s32.totalorder %s77, %s91
      %p93 = scmp.eq.s32.totalorder %s25, 0
      %p94 = por %p92, %p93
      %s95 = ssub.s32 %s26, %s52
      %s96 = ssub.s32 %s27, %s48
      %s97 = sor.u32 %s95, %s96
      %s98 = ssub.s32 %s28, %s44
      %s99 = sor.u32 %s97, %s98
      %s100 = ssub.s32 %s29, %s40
      %s101 = sor.u32 %s99, %s100
      %p102 = scmp.eq.s32.totalorder %s101, 0
      %s104 = sadd.s32 %s103, 1
      %s105 = scalar_select %p102, %s103, %s104
      %p108 = pneg %p102
      %p109 = scmp.eq.s32.totalorder %s19, 7
      %p110 = por %p108, %p109
      %p111 = scmp.ne.s32.totalorder %s103, %s106
      %p112 = scmp.eq.s32.totalorder %s19, 0
      %p113 = por %p111, %p112
      %p114 = scmp.ne.s32.totalorder %s103, %s106
      %p115 = scmp.eq.s32.totalorder %s24, 7
      %p116 = por %p114, %p115
      %p117 = scmp.ne.s32.totalorder %s106, %s107
      %p118 = scmp.eq.s32.totalorder %s24, 0
      %p119 = por %p117, %p118
      %p120 = scmp.ne.s32.totalorder %s106, %s107
      %p121 = scmp.eq.s32.totalorder %s25, 7
      %p122 = por %p120, %p121
      %p124 = scmp.ne.s32.totalorder %s107, %s123
      %p125 = scmp.eq.s32.totalorder %s25, 0
      %p126 = por %p124, %p125
      %s127 = ssub.s32 %s28, %s44
      %p128 = scmp.eq.s32.totalorder %s127, 0
      %s130 = sadd.s32 %s129, 1
      %s131 = scalar_select %p128, %s129, %s130
      %p134 = pneg %p128
      %p135 = scmp.eq.s32.totalorder %s19, 7
      %p136 = por %p134, %p135
      %p137 = scmp.ne.s32.totalorder %s129, %s132
      %p138 = scmp.eq.s32.totalorder %s19, 0
      %p139 = por %p137, %p138
      %p140 = scmp.ne.s32.totalorder %s129, %s132
      %p141 = scmp.eq.s32.totalorder %s24, 7
      %p142 = por %p140, %p141
      %p143 = scmp.ne.s32.totalorder %s132, %s133
      %p144 = scmp.eq.s32.totalorder %s24, 0
      %p145 = por %p143, %p144
      %p146 = scmp.ne.s32.totalorder %s132, %s133
      %p147 = scmp.eq.s32.totalorder %s25, 7
      %p148 = por %p146, %p147
      %p150 = scmp.ne.s32.totalorder %s133, %s149
      %p151 = scmp.eq.s32.totalorder %s25, 0
      %p152 = por %p150, %p151
      %s153 = ssub.s32 %s29, %s40
      %p154 = scmp.eq.s32.totalorder %s153, 0
      %s156 = sadd.s32 %s155, 1
      %s157 = scalar_select %p154, %s155, %s156
      %p160 = pneg %p154
      %p161 = scmp.eq.s32.totalorder %s19, 7
      %p162 = por %p160, %p161
      %p163 = scmp.ne.s32.totalorder %s155, %s158
      %p164 = scmp.eq.s32.totalorder %s19, 0
      %p165 = por %p163, %p164
      %p166 = scmp.ne.s32.totalorder %s155, %s158
      %p167 = scmp.eq.s32.totalorder %s24, 7
      %p168 = por %p166, %p167
      %p169 = scmp.ne.s32.totalorder %s158, %s159
      %p170 = scmp.eq.s32.totalorder %s24, 0
      %p171 = por %p169, %p170
      %p172 = scmp.ne.s32.totalorder %s158, %s159
      %p173 = scmp.eq.s32.totalorder %s25, 7
      %p174 = por %p172, %p173
      %p176 = scmp.ne.s32.totalorder %s159, %s175
      %p177 = scmp.eq.s32.totalorder %s25, 0
      %p178 = por %p176, %p177
      %s179 = ssub.s32 %s26, %s52
      %s180 = ssub.s32 %s27, %s48
      %s181 = sor.u32 %s179, %s180
      %p182 = scmp.eq.s32.totalorder %s181, 0
      %s184 = sadd.s32 %s183, 1
      %s185 = scalar_select %p182, %s183, %s184
      %p188 = pneg %p182
      %p189 = scmp.eq.s32.totalorder %s19, 7
      %p190 = por %p188, %p189
      %p191 = scmp.ne.s32.totalorder %s183, %s186
      %p192 = scmp.eq.s32.totalorder %s19, 0
      %p193 = por %p191, %p192
      %p194 = scmp.ne.s32.totalorder %s183, %s186
      %p195 = scmp.eq.s32.totalorder %s24, 7
      %p196 = por %p194, %p195
      %p197 = scmp.ne.s32.totalorder %s186, %s187
      %p198 = scmp.eq.s32.totalorder %s24, 0
      %p199 = por %p197, %p198
      %p200 = scmp.ne.s32.totalorder %s186, %s187
      %p201 = scmp.eq.s32.totalorder %s25, 7
      %p202 = por %p200, %p201
      %p204 = scmp.ne.s32.totalorder %s187, %s203
      %p205 = scmp.eq.s32.totalorder %s25, 0
      %p206 = por %p204, %p205
      %p207 = scmp.le.s32.totalorder 1, %s19
      %p208 = scmp.lt.s32.totalorder %s19, 9
      %p209 = pnand %p207, %p208
      %p210 = pneg %p209
      // Predicated region
      $region9: #{tpu_custom_call.1} parent=5 // pred_check
        _
      $region10: #{tpu_custom_call.1} parent=5 // pred_check_branch
        %212 = sbr.rel (%p209) target = $region12
      $region11: #{tpu_custom_call.1} parent=5 // pred_region
        %s213 = ssub.s32 %s19, 1
        // Predicated region
        $region13: #{tpu_custom_call.1} parent=11 // pred_check
          %p214 = pneg %p66
        $region14: #{tpu_custom_call.1} parent=11 // pred_check_branch
          %216 = sbr.rel (%p214) target = $region16
        $region15: #{tpu_custom_call.1} parent=11 // pred_region
          %s218 = ssub.s32 16, 16
          %219 = vsyncadd [#allocation6], %s218
          %s221 = sshll.u32 %s0, 4
          %s222 = int_to_ptr.vmem [resolvable:$true] %s221
          %224 = dma.vmem_to_smem %s222, 16, [#allocation3], [#allocation6]
        $region16: #{tpu_custom_call.1} parent=11 // pred_fallthru
          _
        // Predicated region
        $region17: #{tpu_custom_call.1} parent=11 // pred_check
          %p225 = pneg %p87
        $region18: #{tpu_custom_call.1} parent=11 // pred_check_branch
          %227 = sbr.rel (%p225) target = $region20
        $region19: #{tpu_custom_call.1} parent=11 // pred_region
          %s229 = ssub.s32 16, 16
          %230 = vsyncadd [#allocation8], %s229
          %s232 = sshll.u32 %s1, 4
          %s233 = int_to_ptr.vmem [resolvable:$true] %s232
          %235 = dma.vmem_to_smem %s233, 16, [#allocation7], [#allocation8]
        $region20: #{tpu_custom_call.1} parent=11 // pred_fallthru
          _
        // Predicated region
        $region21: #{tpu_custom_call.1} parent=11 // pred_check
          %p236 = pneg %p145
        $region22: #{tpu_custom_call.1} parent=11 // pred_check_branch
          %238 = sbr.rel (%p236) target = $region24
        $region23: #{tpu_custom_call.1} parent=11 // pred_region
          %p239 = scmp.lt.s32.totalorder %s32, 0
          %s240 = scalar_select %p239, %s32, 0
          %s241 = smul.addr %s240, 4
          %s242 = scalar_lea.vmem %s3, %s241
        $region24: #{tpu_custom_call.1} parent=11 // pred_fallthru
          _
        // Predicated region
        $region25: #{tpu_custom_call.1} parent=11 // pred_check
          %p243 = pneg %p171
        $region26: #{tpu_custom_call.1} parent=11 // pred_check_branch
          %245 = sbr.rel (%p243) target = $region28
        $region27: #{tpu_custom_call.1} parent=11 // pred_region
          %s246 = smul.u32 2, %s33
          %p247 = scmp.lt.s32.totalorder %s246, 1
          %s248 = scalar_select %p247, %s246, 1
          %s249 = smul.addr %s248, 4
          %s250 = scalar_lea.vmem %s4, %s249
          %s251 = smul.u32 2, %s33
        $region28: #{tpu_custom_call.1} parent=11 // pred_fallthru
          _
      $region12: #{tpu_custom_call.1} parent=5 // pred_fallthru
        _
      %p252 = scmp.lt.s32.totalorder %s19, 8
      // Predicated region
      $region29: #{tpu_custom_call.1} parent=5 // pred_check
        %p253 = pneg %p252
      $region30: #{tpu_custom_call.1} parent=5 // pred_check_branch
        %255 = sbr.rel (%p253) target = $region32
      $region31: #{tpu_custom_call.1} parent=5 // pred_region
        // Predicated region
        $region33: #{tpu_custom_call.1} parent=31 // pred_check
          %p256 = pneg %p113
        $region34: #{tpu_custom_call.1} parent=31 // pred_check_branch
          %258 = sbr.rel (%p256) target = $region36
        $region35: #{tpu_custom_call.1} parent=31 // pred_region
          %s259 = sand.u32 %s103, 1
          %s260 = scalar_lea.sflag [#allocation4], %s259
          %s261 = sand.u32 %s103, 1
          %s262 = smul.addr %s261, 16
          %s263 = scalar_lea.vmem [#allocation9], %s262
          %s264 = smul.u32 2, %s28
          %s266 = ssub.s32 256, 256
          %267 = vsyncadd %s260, %s266
          %s268 = sadd.s32 %s29, %s264
          %s269 = smul.addr %s27, 2
          %s270 = sadd.s32 %s268, %s269
          %s271 = smul.addr %s26, 8
          %s272 = sadd.s32 %s270, %s271
          %s273 = smul.addr %s272, 128
          %s274 = scalar_lea.hbm %s2, %s273
          %s275 = sshll.u32 %s263, 4
          %s276 = int_to_ptr.vmem [resolvable:$true] %s275
          %281 = dma.hbm_to_vmem [thread:$0]  %s274, 256, %s276, %s260, 128, 128, 8
        $region36: #{tpu_custom_call.1} parent=31 // pred_fallthru
          _
      $region32: #{tpu_custom_call.1} parent=5 // pred_fallthru
        _
      %p282 = scmp.le.s32.totalorder 1, %s19
      %p283 = scmp.lt.s32.totalorder %s19, 9
      %p284 = pnand %p282, %p283
      %p285 = pneg %p284
      // Predicated region
      $region37: #{tpu_custom_call.1} parent=5 // pred_check
        _
      $region38: #{tpu_custom_call.1} parent=5 // pred_check_branch
        %287 = sbr.rel (%p284) target = $region40
      $region39: #{tpu_custom_call.1} parent=5 // pred_region
        %s288 = ssub.s32 %s19, 1
        // Predicated region
        $region41: #{tpu_custom_call.1} parent=39 // pred_check
          %p289 = pneg %p66
        $region42: #{tpu_custom_call.1} parent=39 // pred_check_branch
          %291 = sbr.rel (%p289) target = $region44
        $region43: #{tpu_custom_call.1} parent=39 // pred_region
          %292 = dma.done [#allocation6], 16
        $region44: #{tpu_custom_call.1} parent=39 // pred_fallthru
          _
        // Predicated region
        $region45: #{tpu_custom_call.1} parent=39 // pred_check
          %p293 = pneg %p87
        $region46: #{tpu_custom_call.1} parent=39 // pred_check_branch
          %295 = sbr.rel (%p293) target = $region48
        $region47: #{tpu_custom_call.1} parent=39 // pred_region
          %296 = dma.done [#allocation8], 16
        $region48: #{tpu_custom_call.1} parent=39 // pred_fallthru
          _
        %s297 = sand.u32 %s106, 1
        %s298 = scalar_lea.sflag [#allocation4], %s297
        %s299 = sand.u32 %s106, 1
        %s300 = smul.addr %s299, 16
        %s301 = scalar_lea.vmem [#allocation9], %s300
        // Predicated region
        $region49: #{tpu_custom_call.1} parent=39 // pred_check
          %p302 = pneg %p119
        $region50: #{tpu_custom_call.1} parent=39 // pred_check_branch
          %304 = sbr.rel (%p302) target = $region52
        $region51: #{tpu_custom_call.1} parent=39 // pred_region
          %305 = dma.done %s298, 256
        $region52: #{tpu_custom_call.1} parent=39 // pred_fallthru
          _
        %306 = sfence
        %p307 = pneg %p66
        %p308 = pneg %p63
        %p309 = pneg %p87
        %p310 = pneg %p84
        %s311 = sand.u32 %s106, 1
        %s312 = scalar_lea.sflag [#allocation4], %s311
        %s313 = sand.u32 %s106, 1
        %s314 = smul.addr %s313, 16
        %s315 = scalar_lea.vmem [#allocation9], %s314
        %p316 = pneg %p119
        %p317 = pneg %p116
        %p318 = scmp.lt.s32.totalorder %s32, 0
        %s319 = scalar_select %p318, %s32, 0
        %s320 = smul.addr %s319, 4
        %s321 = scalar_lea.vmem %s3, %s320
        %p322 = pneg %p145
        %p323 = pneg %p142
        %s324 = smul.u32 2, %s33
        %p325 = scmp.lt.s32.totalorder %s324, 1
        %s326 = scalar_select %p325, %s324, 1
        %s327 = smul.addr %s326, 4
        %s328 = scalar_lea.vmem %s4, %s327
        %p329 = pneg %p171
        %p330 = pneg %p168
        %p331 = pneg %p199
        %p332 = pneg %p196
        %s333 = sand.u32 %s186, 1
        %s334 = scalar_lea.sflag [#allocation5], %s333
        %s335 = sand.u32 %s186, 1
        %s336 = smul.addr %s335, 8
        %s337 = scalar_lea.vmem [#allocation10], %s336
        %s338 = smul.u32 2, %s32
        %p339 = scmp.lt.s32.totalorder %s32, 0
        %s340 = scalar_select %p339, %s32, 0
        %s341 = smul.addr %s340, 4
        %s342 = scalar_lea.vmem %s3, %s341
        %s343 = smul.u32 2, %s33
        %p344 = scmp.lt.s32.totalorder %s343, 1
        %s345 = scalar_select %p344, %s343, 1
        %s346 = smul.addr %s345, 4
        %s347 = scalar_lea.vmem %s4, %s346
        %s348 = smul.u32 2, %s33
        %p350 = scmp.eq.s32.totalorder %s32, 0
        %p351 = scmp.eq.s32.totalorder %s33, 0
        %p352 = pnand %p350, %p351
        %p353 = pneg %p352
        // Predicated region
        $region53: #{tpu_custom_call.1} parent=39 // pred_check
          _
        $region54: #{tpu_custom_call.1} parent=39 // pred_check_branch
          %355 = sbr.rel (%p352) target = $region56
        $region55: #{tpu_custom_call.1} parent=39 // pred_region
          %vm356 = vcmask 64512
          %357 = vst.msk [vmem:[#allocation2] sm:$0xff] %vm356, 0.0
        $region56: #{tpu_custom_call.1} parent=39 // pred_fallthru
          _
        %v358 = vld [vmem:[%s301] sm:$0xff]
        %v359 = vld [vmem:[%s301 + $0x8] sm:$0xff]
        %v360 = vpack.c.bf16 %v359, %v358
        %v361 = vld [vmem:[%s347] sm:$0xf]
        %v362 = vld [vmem:[%s347 + $0x4] sm:$0xf]
        %v365 = vunpack.c.l.b16 %v361
        %v366 = vunpack.c.l.b16 %v362
        %v367 = vpack.c.b16 %v366, %v365
        %vm369 = vcmask 130048
        %v371 = vsel %vm369, %v360, 0
        %373 = vmatprep.subr.bf16.mxu0 0
        %374 = vmatpush1.bf16.msra.mxu0 %v367
        %375 = vmatprep.subr.bf16.mxu0 0
        %376 = vmatpush1.bf16.msra.mxu0 0
        %377 = vmatprep.subr.bf16.mxu0 0
        %378 = vmatpush1.bf16.msra.mxu0 0
        %379 = vmatprep.subr.bf16.mxu0 0
        %380 = vmatpush1.bf16.msra.mxu0 0
        %381 = vmatprep.subr.bf16.mxu0 0
        %382 = vmatpush1.bf16.msra.mxu0 0
        %383 = vmatprep.subr.bf16.mxu0 0
        %384 = vmatpush1.bf16.msra.mxu0 0
        %385 = vmatprep.subr.bf16.mxu0 0
        %386 = vmatpush1.bf16.msra.mxu0 0
        %387 = vmatprep.subr.bf16.mxu0 0
        %388 = vmatpush1.bf16.msra.mxu0 0
        %389 = vmatprep.subr.bf16.mxu0 0
        %390 = vmatpush1.bf16.msra.mxu0 0
        %391 = vmatprep.subr.bf16.mxu0 0
        %392 = vmatpush1.bf16.msra.mxu0 0
        %393 = vmatprep.subr.bf16.mxu0 0
        %394 = vmatpush1.bf16.msra.mxu0 0
        %395 = vmatprep.subr.bf16.mxu0 0
        %396 = vmatpush1.bf16.msra.mxu0 0
        %397 = vmatprep.subr.bf16.mxu0 0
        %398 = vmatpush1.bf16.msra.mxu0 0
        %399 = vmatprep.subr.bf16.mxu0 0
        %400 = vmatpush1.bf16.msra.mxu0 0
        %401 = vmatprep.subr.bf16.mxu0 0
        %402 = vmatpush1.bf16.msra.mxu0 0
        %403 = vmatprep.subr.bf16.mxu0 0
        %404 = vmatpush1.bf16.msra.mxu0 0
        %405 = vmatprep.mubr.bf16.mxu0 0
        %406 = vmatmul.mubr.bf16.gmra.mrb[0].mxu0 %v371
        %v407 = vpop.f32.mrb[0].mxu0
        %v408 = vadd.f32 0.0, %v407
        %v409 = vpop.f32.mrb[0].mxu0
        %v410 = vpop.f32.mrb[0].mxu0
        %v411 = vadd.f32 0.0, %v410
        %v412 = vpop.f32.mrb[0].mxu0
        %413 = vdwg.mxu0
        %v414 = vld [vmem:[#allocation2] sm:$0xff]
        %v415 = vld [vmem:[%s342] sm:$0xf]
        %v416 = vpack.c.bf16 %v411, %v408
        %v418 = vsel %vm369, %v415, 0
        %420 = vmatprep.subr.bf16.mxu0 0
        %421 = vmatpush1.bf16.msra.mxu0 %v416
        %422 = vmatprep.subr.bf16.mxu0 0
        %423 = vmatpush1.bf16.msra.mxu0 0
        %424 = vmatprep.subr.bf16.mxu0 0
        %425 = vmatpush1.bf16.msra.mxu0 0
        %426 = vmatprep.subr.bf16.mxu0 0
        %427 = vmatpush1.bf16.msra.mxu0 0
        %428 = vmatprep.subr.bf16.mxu0 0
        %429 = vmatpush1.bf16.msra.mxu0 0
        %430 = vmatprep.subr.bf16.mxu0 0
        %431 = vmatpush1.bf16.msra.mxu0 0
        %432 = vmatprep.subr.bf16.mxu0 0
        %433 = vmatpush1.bf16.msra.mxu0 0
        %434 = vmatprep.subr.bf16.mxu0 0
        %435 = vmatpush1.bf16.msra.mxu0 0
        %436 = vmatprep.subr.bf16.mxu0 0
        %437 = vmatpush1.bf16.msra.mxu0 0
        %438 = vmatprep.subr.bf16.mxu0 0
        %439 = vmatpush1.bf16.msra.mxu0 0
        %440 = vmatprep.subr.bf16.mxu0 0
        %441 = vmatpush1.bf16.msra.mxu0 0
        %442 = vmatprep.subr.bf16.mxu0 0
        %443 = vmatpush1.bf16.msra.mxu0 0
        %444 = vmatprep.subr.bf16.mxu0 0
        %445 = vmatpush1.bf16.msra.mxu0 0
        %446 = vmatprep.subr.bf16.mxu0 0
        %447 = vmatpush1.bf16.msra.mxu0 0
        %448 = vmatprep.subr.bf16.mxu0 0
        %449 = vmatpush1.bf16.msra.mxu0 0
        %450 = vmatprep.subr.bf16.mxu0 0
        %451 = vmatpush1.bf16.msra.mxu0 0
        %452 = vmatprep.mubr.bf16.mxu0 0
        %453 = vmatmul.mubr.bf16.gmra.mrb[0].mxu0 %v418
        %v454 = vpop.f32.mrb[0].mxu0
        %v455 = vadd.f32 0.0, %v454
        %v456 = vpop.f32.mrb[0].mxu0
        %v457 = vpop.f32.mrb[0].mxu0
        %v458 = vpop.f32.mrb[0].mxu0
        %459 = vdwg.mxu0
        %v460 = vadd.f32 %v414, %v455
        %vm461 = vcmask 64512
        %462 = vst.msk [vmem:[#allocation2] sm:$0xff] %vm461, %v460
        // Predicated region
        $region57: #{tpu_custom_call.1} parent=39 // pred_check
          _
        $region58: #{tpu_custom_call.1} parent=39 // pred_check_branch
          %464 = sbr.rel (%p352) target = $region60
        $region59: #{tpu_custom_call.1} parent=39 // pred_region
          %v465 = vld [vmem:[#allocation2] sm:$0xff]
          %s466 = sld [smem:[#allocation3 + %s31]]
          %v467 = vstv %s466
          %v468 = vmul.f32 %v465, %v467
          %s469 = sld [smem:[#allocation7 + %s31]]
          %v470 = vstv %s469
          %v471 = vadd.f32 %v468, %v470
          %472 = vst.msk [vmem:[%s337] sm:$0xff] %vm461, %v471
        $region60: #{tpu_custom_call.1} parent=39 // pred_fallthru
          _
        %s473 = sand.u32 %s186, 1
        %s474 = scalar_lea.sflag [#allocation5], %s473
        %s475 = sand.u32 %s186, 1
        %s476 = smul.addr %s475, 8
        %s477 = scalar_lea.vmem [#allocation10], %s476
        // Predicated region
        $region61: #{tpu_custom_call.1} parent=39 // pred_check
          %p478 = pneg %p196
        $region62: #{tpu_custom_call.1} parent=39 // pred_check_branch
          %480 = sbr.rel (%p478) target = $region64
        $region63: #{tpu_custom_call.1} parent=39 // pred_region
          %s482 = ssub.s32 128, 128
          %483 = vsyncadd %s474, %s482
          %s484 = smul.addr %s30, 4
          %s485 = sadd.s32 %s31, %s484
          %s486 = smul.addr %s485, 128
          %s487 = scalar_lea.hbm %s5, %s486
          %s489 = sshll.u32 %s477, 4
          %s490 = int_to_ptr.vmem [resolvable:$true] %s489
          %492 = dma.vmem_to_hbm [thread:$0]  %s490, 128, %s487, %s474
        $region64: #{tpu_custom_call.1} parent=39 // pred_fallthru
          _
      $region40: #{tpu_custom_call.1} parent=5 // pred_fallthru
        _
      %p493 = scmp.le.s32.totalorder 2, %s19
      // Predicated region
      $region65: #{tpu_custom_call.1} parent=5 // pred_check
        %p494 = pneg %p493
      $region66: #{tpu_custom_call.1} parent=5 // pred_check_branch
        %496 = sbr.rel (%p494) target = $region68
      $region67: #{tpu_custom_call.1} parent=5 // pred_region
        %s497 = ssub.s32 %s19, 2
        // Predicated region
        $region69: #{tpu_custom_call.1} parent=67 // pred_check
          %p498 = pneg %p202
        $region70: #{tpu_custom_call.1} parent=67 // pred_check_branch
          %500 = sbr.rel (%p498) target = $region72
        $region71: #{tpu_custom_call.1} parent=67 // pred_region
          %s501 = sand.u32 %s187, 1
          %s502 = scalar_lea.sflag [#allocation5], %s501
          %s503 = sand.u32 %s187, 1
          %s504 = smul.addr %s503, 8
          %s505 = scalar_lea.vmem [#allocation10], %s504
          %506 = dma.done %s502, 128
        $region72: #{tpu_custom_call.1} parent=67 // pred_fallthru
          _
      $region68: #{tpu_custom_call.1} parent=5 // pred_fallthru
        _
    $region6: #{tpu_custom_call.1} parent=1 // loop_footer
      %s23 = sadd.s32 1, %s19
    $region7: #{tpu_custom_call.1} parent=1 // loop_footer_branch
      %18 = sbr.rel target = $region3
    $region8: #{tpu_custom_call.1} parent=1 // loop_exit
      _
    %507 = vsyncpa [#allocation4], 1
    %s508 = scalar_lea.sflag [#allocation4], 1
    %509 = vsyncpa %s508, 1
    %510 = vsyncpa [#allocation5], 1
    %s511 = scalar_lea.sflag [#allocation5], 1
    %512 = vsyncpa %s511, 1
    %513 = vsyncpa [#allocation6], 1
    %s514 = scalar_lea.sflag [#allocation6], 1
    %515 = vsyncpa %s514, 1
    %516 = vsyncpa [#allocation8], 1

</llo_original>
